<compile_context>
chip_gen: v7x
topology: tpu7x:2x2x1
jax: 0.10.0
libtpu: 0.0.40
codegen_flags: <defaults>
</compile_context>

<pallas_src>
import functools

import numpy as np
import jax
import jax.numpy as jnp
from jax.experimental import pallas as pl
from jax.experimental.pallas import tpu as pltpu


# ---------------------------------------------------------------------------
# Device-dependent configuration
# ---------------------------------------------------------------------------
def _device_kind():
    try:
        return jax.devices()[0].device_kind.lower()
    except Exception:
        return ""


def _default_compute_dtype():
    """bf16 pair stage / MXU operands on v6e & v7x; f32 elsewhere (v5e has no bf16 VPU)."""
    kind = _device_kind()
    if "v6" in kind or "v7" in kind or "7x" in kind:
        return jnp.bfloat16
    return jnp.float32


def _vmem_limit_bytes():
    kind = _device_kind()
    if "v7" in kind or "7x" in kind:      # 64 MiB physical VMEM
        return 40 * 1024 * 1024
    if "v5" in kind or "v6" in kind:      # 128 MiB physical VMEM
        return 64 * 1024 * 1024
    return None                            # unknown chip: leave compiler default


def _round_up(x, m):
    return ((x + m - 1) // m) * m


# Per-grid-step budget for the [Bblk, TILE_I, L, C] pair-stage intermediate.
_PAIR_BUDGET_BYTES = 8 * 1024 * 1024


def _choose_tiles(bs, L, C, pair_bytes):
    """Pick (tile_i, bblk, L_pad, bs_pad) so the pair-stage tile fits VMEM."""
    l_pad8 = _round_up(L, 8)
    if l_pad8 * l_pad8 * C * pair_bytes <= _PAIR_BUDGET_BYTES:
        tile_i = l_pad8                        # whole row range in one step
    else:
        # Row-tile the i axis; multiples of 32 keep the int8 adj block legal.
        tile_i = 32
        while (tile_i * 2 <= 128
               and tile_i * 2 * l_pad8 * C * pair_bytes <= _PAIR_BUDGET_BYTES):
            tile_i *= 2
        tile_i = min(tile_i, l_pad8)
    L_pad = _round_up(L, tile_i)

    # Batch several sequences per grid step to fill the MXU M dim and amortize
    # per-step overhead (important for small L).
    bblk = 1
    while (bblk * 2 <= min(bs, 8)
           and bblk * 2 * tile_i * L_pad * C * pair_bytes <= _PAIR_BUDGET_BYTES):
        bblk *= 2
    bs_pad = _round_up(bs, bblk)
    return tile_i, bblk, L_pad, bs_pad


# ---------------------------------------------------------------------------
# Kernel
# ---------------------------------------------------------------------------
def _syntac_gcn_kernel(q_rows_ref, q_full_ref, adj_ref,
                       w_i_ref, w_jd_ref, w2_ref, out_ref,
                       *, skip, compute_dtype):
    bblk, tile_i, d = q_rows_ref.shape
    l = q_full_ref.shape[1]
    c = w_i_ref.shape[1]
    approx = jnp.dtype(compute_dtype) == jnp.dtype(jnp.bfloat16)

    q_rows = q_rows_ref[...]                               # [Bblk, TI, D] (residual, f32)
    q_full = q_full_ref[...]                               # [Bblk, L,  D]
    adj = adj_ref[...].astype(jnp.float32)                 # int8 {-1,0,1} -> f32 masks

    # Fused projections: one wide MXU matmul per q view (weights pre-transposed
    # & concatenated in the wrapper; no in-kernel transposes).
    a_all = jnp.dot(
        q_rows.reshape(bblk * tile_i, d).astype(compute_dtype), w_i_ref[...],
        preferred_element_type=jnp.float32).reshape(bblk, tile_i, c)
    bh_all = jnp.dot(
        q_full.reshape(bblk * l, d).astype(compute_dtype), w_jd_ref[...],
        preferred_element_type=jnp.float32).reshape(bblk, l, 2 * c)

    a_all = a_all.astype(compute_dtype)                    # W1_i @ q_i      [Bblk, TI, C]
    b_all = bh_all[:, :, :c].astype(compute_dtype)         # W1_j @ q_j      [Bblk, L,  C]
    h_all = bh_all[:, :, c:].astype(compute_dtype)         # Wd   @ q_j      [Bblk, L,  C]
    w2 = w2_ref[...]                                       # [1, C] (compute_dtype)

    for bb in range(bblk):                                 # short static unroll
        # Pair stage (VALU bound): score every (i, j) pair of this row tile.
        hid = jnp.maximum(a_all[bb][:, None, :] + b_all[bb][None, :, :], 0)   # [TI, L, C]
        s = jnp.sum((hid * w2).astype(jnp.float32), axis=-1)                  # [TI, L]

        adj_b = adj[bb]                                                       # [TI, L]
        t = jnp.where(adj_b != 0.0, s, jnp.float32(-100.0))
        t = t - jnp.max(t, axis=-1, keepdims=True)
        e = jnp.exp(t)
        inv = pl.reciprocal(jnp.sum(e, axis=-1, keepdims=True), approx=approx)
        beta = e * inv                                                        # softmax_j
        m = jnp.where(adj_b > 0.0, beta, 0.0)                                 # [TI, L]

        agg = jnp.dot(m.astype(compute_dtype), h_all[bb],
                      preferred_element_type=jnp.float32)                     # [TI, C]

        out = jnp.maximum(q_rows[bb] + agg, 0.0)
        if skip:
            out = out + q_rows[bb]
        out_ref[bb] = out.astype(out_ref.dtype)


# ---------------------------------------------------------------------------
# Wrapper
# ---------------------------------------------------------------------------
def syntac_gcn_forward(queries, wordlens, syntactic_dep, params, skip=False,
                       compute_dtype=None):
    """Pallas TPU implementation of Syntac_GCN.forward (dropout = identity)."""
    if compute_dtype is None:
        compute_dtype = _default_compute_dtype()

    bs, L, D = queries.shape
    adj = syntactic_dep[:, :L, :L]

    W1 = jnp.asarray(params["w_wc_0"])     # [C, 2*D]
    W2 = jnp.asarray(params["w_wc_1"])     # [1, C]
    Wd = jnp.asarray(params["wd"])         # [C, C]
    C = W1.shape[0]
    assert C == D, "Syntac_GCN implicitly requires channel_out == query dim"

    # Wrapper-side layout plumbing: pre-transpose & fuse the projection weights.
    w_i = W1[:, :D].T.astype(compute_dtype)                                    # [D, C]
    w_jd = jnp.concatenate([W1[:, D:].T, Wd.T], axis=1).astype(compute_dtype)  # [D, 2C]
    w2 = W2.astype(compute_dtype)                                              # [1, C]

    # adj is only consumed via (adj != 0) and (adj > 0): ship signs as int8.
    adj_i8 = jnp.sign(adj).astype(jnp.int8)

    pair_bytes = jnp.dtype(compute_dtype).itemsize
    tile_i, bblk, L_pad, bs_pad = _choose_tiles(bs, L, C, pair_bytes)

    q = queries
    if bs_pad != bs or L_pad != L:
        # Zero padding is exact: padded columns score -100 (negligible in the
        # softmax) and are masked out of the aggregation; padded rows are sliced off.
        q = jnp.pad(q, ((0, bs_pad - bs), (0, L_pad - L), (0, 0)))
        adj_i8 = jnp.pad(adj_i8, ((0, bs_pad - bs), (0, L_pad - L), (0, L_pad - L)))

    grid = (bs_pad // bblk, L_pad // tile_i)
    kernel = functools.partial(_syntac_gcn_kernel, skip=skip,
                               compute_dtype=compute_dtype)

    out = pl.pallas_call(
        kernel,
        out_shape=jax.ShapeDtypeStruct((bs_pad, L_pad, D), queries.dtype),
        grid_spec=pltpu.PrefetchScalarGridSpec(
            num_scalar_prefetch=0,
            grid=grid,
            in_specs=[
                # queries: the i-tile rows (for A and the residual)
                pl.BlockSpec((bblk, tile_i, D), lambda b, i: (b, i, 0)),
                # queries: the full (padded) sequence (for W1_j and Wd projections)
                pl.BlockSpec((bblk, L_pad, D), lambda b, i: (b, 0, 0)),
                # adjacency: rows of this tile, all columns, int8 signs
                pl.BlockSpec((bblk, tile_i, L_pad), lambda b, i: (b, i, 0)),
                # constant weights
                pl.BlockSpec((D, C), lambda b, i: (0, 0)),
                pl.BlockSpec((D, 2 * C), lambda b, i: (0, 0)),
                pl.BlockSpec((1, C), lambda b, i: (0, 0)),
            ],
            out_specs=pl.BlockSpec((bblk, tile_i, D), lambda b, i: (b, i, 0)),
        ),
        compiler_params=pltpu.CompilerParams(
            dimension_semantics=("parallel", "parallel"),
            vmem_limit_bytes=_vmem_limit_bytes(),
        ),
    )(q, q, adj_i8, w_i, w_jd, w2)

    out = out[:bs, :L, :]
    return [out, wordlens, adj]


# ---------------------------------------------------------------------------
# NumPy reference (port of the PyTorch per-batch scatter loop)
# ---------------------------------------------------------------------------
def reference_forward(queries, syntactic_dep, W1, W2, Wd, skip=False):
    queries = np.asarray(queries, dtype=np.float32)
    adj = np.asarray(syntactic_dep, dtype=np.float32)
    bs, L, D = queries.shape
    adj = adj[:, :L, :L]
    outs = []
    for b in range(bs):
        ii, jj = np.nonzero(adj[b])
        h = np.concatenate([queries[b, ii], queries[b, jj]], axis=1)      # [E, 2D]
        t = np.maximum(h @ np.asarray(W1).T, 0.0) @ np.asarray(W2).T      # [E, 1]
        T = np.full((L, L), -100.0, dtype=np.float32)
        T[ii, jj] = t[:, 0]
        Tm = T - T.max(axis=1, keepdims=True)
        e = np.exp(Tm)
        beta = e / e.sum(axis=1, keepdims=True)
        H = np.zeros((L, L, D), dtype=np.float32)
        H[ii, jj, :] = queries[b, jj] @ np.asarray(Wd).T
        H = H * beta[:, :, None]
        H = H * (adj[b] > 0)[:, :, None]
        outs.append(np.maximum(queries[b] + H.sum(axis=1), 0.0))
    out = np.stack(outs, axis=0)
    if skip:
        out = out + queries
    return out


if __name__ == "__main__":
    bs, L, D = 2, 8, 32          # channel_in == channel_out == 32
    C = D
    skip = False

    key = jax.random.PRNGKey(0)
    kq, ka, km, k1, k2, k3 = jax.random.split(key, 6)

    queries = jax.random.normal(kq, (bs, L, D), dtype=jnp.float32)
    # Sparse-ish dependency matrix with positive and negative entries.
    vals = jax.random.normal(ka, (bs, L, L), dtype=jnp.float32)
    mask = (jax.random.uniform(km, (bs, L, L)) < 0.3).astype(jnp.float32)
    syntactic_dep = vals * mask
    wordlens = jnp.full((bs,), L, dtype=jnp.int32)

    # Deterministic parameter init (PyTorch-Linear-like uniform scaling).
    params = {
        "w_wc_0": jax.random.uniform(k1, (C, 2 * D), jnp.float32,
                                     -1.0, 1.0) / np.sqrt(2 * D),
        "w_wc_1": jax.random.uniform(k2, (1, C), jnp.float32,
                                     -1.0, 1.0) / np.sqrt(C),
        "wd": jax.random.uniform(k3, (C, C), jnp.float32,
                                 -1.0, 1.0) / np.sqrt(C),
    }

    compute_dtype = _default_compute_dtype()
    out, wl_out, adj_out = syntac_gcn_forward(
        queries, wordlens, syntactic_dep, params, skip=skip,
        compute_dtype=compute_dtype)
    out = jax.block_until_ready(out)

    ref = reference_forward(queries, syntactic_dep,
                            params["w_wc_0"], params["w_wc_1"], params["wd"],
                            skip=skip)
    if jnp.dtype(compute_dtype) == jnp.dtype(jnp.bfloat16):
        rtol, atol = 5e-2, 3e-2     # bf16 pair stage / MXU operands (v6e / v7x)
    else:
        rtol, atol = 1e-5, 1e-5     # pure f32 path (v5e and older)
    np.testing.assert_allclose(np.asarray(out), ref, rtol=rtol, atol=atol)

    print("KERNEL_OK")
</pallas_src>

<mosaic_0001>
module attributes {stable_mosaic.version = 11 : i64} {
  func.func @_syntac_gcn_kernel(%arg0: i32, %arg1: i32, %arg2: memref<2x8x32xf32, #tpu.memory_space<vmem>>, %arg3: memref<2x8x32xf32, #tpu.memory_space<vmem>>, %arg4: memref<2x8x8xi8, #tpu.memory_space<vmem>>, %arg5: memref<32x32xf32, #tpu.memory_space<vmem>>, %arg6: memref<32x64xf32, #tpu.memory_space<vmem>>, %arg7: memref<1x32xf32, #tpu.memory_space<vmem>>, %arg8: memref<2x8x32xf32, #tpu.memory_space<vmem>>) attributes {dimension_semantics = [#tpu.dimension_semantics<parallel>, #tpu.dimension_semantics<parallel>], iteration_bounds = array<i64: 1, 1>, scalar_prefetch = 0 : i64, scratch_operands = 0 : i64, tpu.core_type = #tpu.core_type<tc>, window_params = [{transform_indices = @transform_0, window_bounds = array<i64: 2, 8, 32>}, {transform_indices = @transform_1, window_bounds = array<i64: 2, 8, 32>}, {transform_indices = @transform_2, window_bounds = array<i64: 2, 8, 8>}, {pipeline_mode = #tpu.pipeline_mode<synchronous>, transform_indices = @transform_3, window_bounds = array<i64: 32, 32>}, {pipeline_mode = #tpu.pipeline_mode<synchronous>, transform_indices = @transform_4, window_bounds = array<i64: 32, 64>}, {pipeline_mode = #tpu.pipeline_mode<synchronous>, transform_indices = @transform_5, window_bounds = array<i64: 1, 32>}, {transform_indices = @transform_6, window_bounds = array<i64: 2, 8, 32>}]} {
    %c0 = arith.constant 0 : index
    %c0_0 = arith.constant 0 : index
    %c0_1 = arith.constant 0 : index
    %0 = vector.load %arg2[%c0, %c0_0, %c0_1] : memref<2x8x32xf32, #tpu.memory_space<vmem>>, vector<2x8x32xf32>
    %c0_2 = arith.constant 0 : index
    %c0_3 = arith.constant 0 : index
    %c0_4 = arith.constant 0 : index
    %1 = vector.load %arg3[%c0_2, %c0_3, %c0_4] : memref<2x8x32xf32, #tpu.memory_space<vmem>>, vector<2x8x32xf32>
    %c0_5 = arith.constant 0 : index
    %c0_6 = arith.constant 0 : index
    %c0_7 = arith.constant 0 : index
    %2 = vector.load %arg4[%c0_5, %c0_6, %c0_7] : memref<2x8x8xi8, #tpu.memory_space<vmem>>, vector<2x8x8xi8>
    %3 = arith.sitofp %2 : vector<2x8x8xi8> to vector<2x8x8xf32>
    %4 = vector.shape_cast %0 : vector<2x8x32xf32> to vector<16x32xf32>
    %c0_8 = arith.constant 0 : index
    %c0_9 = arith.constant 0 : index
    %5 = vector.load %arg5[%c0_8, %c0_9] : memref<32x32xf32, #tpu.memory_space<vmem>>, vector<32x32xf32>
    %cst = arith.constant dense<0.000000e+00> : vector<16x32xf32>
    %6 = tpu.matmul %4, %5, %cst {dimension_numbers = #tpu.dot_dimension_numbers<[1], [0], [0], [1], [0, 0, 1, 1], [], []>} : vector<16x32xf32>, vector<32x32xf32>, vector<16x32xf32> -> vector<16x32xf32>
    %7 = vector.shape_cast %6 : vector<16x32xf32> to vector<2x8x32xf32>
    %8 = vector.shape_cast %1 : vector<2x8x32xf32> to vector<16x32xf32>
    %c0_10 = arith.constant 0 : index
    %c0_11 = arith.constant 0 : index
    %9 = vector.load %arg6[%c0_10, %c0_11] : memref<32x64xf32, #tpu.memory_space<vmem>>, vector<32x64xf32>
    %cst_12 = arith.constant dense<0.000000e+00> : vector<16x64xf32>
    %10 = tpu.matmul %8, %9, %cst_12 {dimension_numbers = #tpu.dot_dimension_numbers<[1], [0], [0], [1], [0, 0, 1, 1], [], []>} : vector<16x32xf32>, vector<32x64xf32>, vector<16x64xf32> -> vector<16x64xf32>
    %11 = vector.shape_cast %10 : vector<16x64xf32> to vector<2x8x64xf32>
    %12 = vector.extract_strided_slice %11 {offsets = [0, 0, 0], sizes = [2, 8, 32], strides = [1, 1, 1]} : vector<2x8x64xf32> to vector<2x8x32xf32>
    %13 = vector.extract_strided_slice %11 {offsets = [0, 0, 32], sizes = [2, 8, 32], strides = [1, 1, 1]} : vector<2x8x64xf32> to vector<2x8x32xf32>
    %c0_13 = arith.constant 0 : index
    %c0_14 = arith.constant 0 : index
    %14 = vector.load %arg7[%c0_13, %c0_14] : memref<1x32xf32, #tpu.memory_space<vmem>>, vector<1x32xf32>
    %15 = vector.extract_strided_slice %7 {offsets = [0, 0, 0], sizes = [1, 8, 32], strides = [1, 1, 1]} : vector<2x8x32xf32> to vector<1x8x32xf32>
    %16 = vector.shape_cast %15 : vector<1x8x32xf32> to vector<8x32xf32>
    %17 = vector.shape_cast %16 : vector<8x32xf32> to vector<8x1x32xf32>
    %18 = vector.extract_strided_slice %12 {offsets = [0, 0, 0], sizes = [1, 8, 32], strides = [1, 1, 1]} : vector<2x8x32xf32> to vector<1x8x32xf32>
    %19 = vector.shape_cast %18 : vector<1x8x32xf32> to vector<8x32xf32>
    %20 = vector.shape_cast %19 : vector<8x32xf32> to vector<1x8x32xf32>
    %21 = vector.broadcast %17 : vector<8x1x32xf32> to vector<8x8x32xf32>
    %22 = vector.broadcast %20 : vector<1x8x32xf32> to vector<8x8x32xf32>
    %23 = arith.addf %21, %22 : vector<8x8x32xf32>
    %cst_15 = arith.constant 0.000000e+00 : f32
    %24 = vector.broadcast %cst_15 : f32 to vector<8x8x32xf32>
    %25 = arith.maximumf %23, %24 : vector<8x8x32xf32>
    %26 = vector.shape_cast %14 : vector<1x32xf32> to vector<1x1x32xf32>
    %27 = vector.broadcast %26 : vector<1x1x32xf32> to vector<8x8x32xf32>
    %28 = arith.mulf %25, %27 : vector<8x8x32xf32>
    %cst_16 = arith.constant dense<0.000000e+00> : vector<8x8xf32>
    %29 = vector.multi_reduction <add>, %28, %cst_16 [2] : vector<8x8x32xf32> to vector<8x8xf32>
    %30 = vector.extract_strided_slice %3 {offsets = [0, 0, 0], sizes = [1, 8, 8], strides = [1, 1, 1]} : vector<2x8x8xf32> to vector<1x8x8xf32>
    %31 = vector.shape_cast %30 : vector<1x8x8xf32> to vector<8x8xf32>
    %cst_17 = arith.constant 0.000000e+00 : f32
    %32 = vector.broadcast %cst_17 : f32 to vector<8x8xf32>
    %33 = arith.cmpf one, %31, %32 : vector<8x8xf32>
    %cst_18 = arith.constant -1.000000e+02 : f32
    %34 = vector.broadcast %cst_18 : f32 to vector<8x8xf32>
    %35 = arith.select %33, %29, %34 : vector<8x8xi1>, vector<8x8xf32>
    %cst_19 = arith.constant dense<0xFF800000> : vector<8xf32>
    %36 = vector.multi_reduction <maximumf>, %35, %cst_19 [1] : vector<8x8xf32> to vector<8xf32>
    %37 = vector.shape_cast %36 : vector<8xf32> to vector<8x1xf32>
    %38 = vector.broadcast %37 : vector<8x1xf32> to vector<8x8xf32>
    %39 = arith.subf %35, %38 : vector<8x8xf32>
    %40 = math.exp %39 : vector<8x8xf32>
    %cst_20 = arith.constant dense<0.000000e+00> : vector<8xf32>
    %41 = vector.multi_reduction <add>, %40, %cst_20 [1] : vector<8x8xf32> to vector<8xf32>
    %42 = vector.shape_cast %41 : vector<8xf32> to vector<8x1xf32>
    %43 = tpu.reciprocal %42 : vector<8x1xf32> -> vector<8x1xf32>
    %44 = vector.broadcast %43 : vector<8x1xf32> to vector<8x8xf32>
    %45 = arith.mulf %40, %44 : vector<8x8xf32>
    %cst_21 = arith.constant 0.000000e+00 : f32
    %46 = vector.broadcast %cst_21 : f32 to vector<8x8xf32>
    %47 = arith.cmpf ogt, %31, %46 : vector<8x8xf32>
    %cst_22 = arith.constant 0.000000e+00 : f32
    %48 = vector.broadcast %cst_22 : f32 to vector<8x8xf32>
    %49 = arith.select %47, %45, %48 : vector<8x8xi1>, vector<8x8xf32>
    %50 = vector.extract_strided_slice %13 {offsets = [0, 0, 0], sizes = [1, 8, 32], strides = [1, 1, 1]} : vector<2x8x32xf32> to vector<1x8x32xf32>
    %51 = vector.shape_cast %50 : vector<1x8x32xf32> to vector<8x32xf32>
    %cst_23 = arith.constant dense<0.000000e+00> : vector<8x32xf32>
    %52 = tpu.matmul %49, %51, %cst_23 {dimension_numbers = #tpu.dot_dimension_numbers<[1], [0], [0], [1], [0, 0, 1, 1], [], []>} : vector<8x8xf32>, vector<8x32xf32>, vector<8x32xf32> -> vector<8x32xf32>
    %53 = vector.extract_strided_slice %0 {offsets = [0, 0, 0], sizes = [1, 8, 32], strides = [1, 1, 1]} : vector<2x8x32xf32> to vector<1x8x32xf32>
    %54 = vector.shape_cast %53 : vector<1x8x32xf32> to vector<8x32xf32>
    %55 = arith.addf %54, %52 : vector<8x32xf32>
    %cst_24 = arith.constant 0.000000e+00 : f32
    %56 = vector.broadcast %cst_24 : f32 to vector<8x32xf32>
    %57 = arith.maximumf %55, %56 : vector<8x32xf32>
    %c0_25 = arith.constant 0 : index
    %c0_26 = arith.constant 0 : index
    %c0_27 = arith.constant 0 : index
    %58 = vector.load %arg8[%c0_25, %c0_26, %c0_27] : memref<2x8x32xf32, #tpu.memory_space<vmem>>, vector<1x8x32xf32>
    %59 = vector.shape_cast %58 : vector<1x8x32xf32> to vector<8x32xf32>
    %60 = vector.shape_cast %57 : vector<8x32xf32> to vector<1x8x32xf32>
    tpu.vector_store %arg8[%c0_25, %c0_26, %c0_27], %60 {strides = array<i32>} : memref<2x8x32xf32, #tpu.memory_space<vmem>>, vector<1x8x32xf32>,
    %61 = vector.extract_strided_slice %7 {offsets = [1, 0, 0], sizes = [1, 8, 32], strides = [1, 1, 1]} : vector<2x8x32xf32> to vector<1x8x32xf32>
    %62 = vector.shape_cast %61 : vector<1x8x32xf32> to vector<8x32xf32>
    %63 = vector.shape_cast %62 : vector<8x32xf32> to vector<8x1x32xf32>
    %64 = vector.extract_strided_slice %12 {offsets = [1, 0, 0], sizes = [1, 8, 32], strides = [1, 1, 1]} : vector<2x8x32xf32> to vector<1x8x32xf32>
    %65 = vector.shape_cast %64 : vector<1x8x32xf32> to vector<8x32xf32>
    %66 = vector.shape_cast %65 : vector<8x32xf32> to vector<1x8x32xf32>
    %67 = vector.broadcast %63 : vector<8x1x32xf32> to vector<8x8x32xf32>
    %68 = vector.broadcast %66 : vector<1x8x32xf32> to vector<8x8x32xf32>
    %69 = arith.addf %67, %68 : vector<8x8x32xf32>
    %cst_28 = arith.constant 0.000000e+00 : f32
    %70 = vector.broadcast %cst_28 : f32 to vector<8x8x32xf32>
    %71 = arith.maximumf %69, %70 : vector<8x8x32xf32>
    %72 = vector.shape_cast %14 : vector<1x32xf32> to vector<1x1x32xf32>
    %73 = vector.broadcast %72 : vector<1x1x32xf32> to vector<8x8x32xf32>
    %74 = arith.mulf %71, %73 : vector<8x8x32xf32>
    %cst_29 = arith.constant dense<0.000000e+00> : vector<8x8xf32>
    %75 = vector.multi_reduction <add>, %74, %cst_29 [2] : vector<8x8x32xf32> to vector<8x8xf32>
    %76 = vector.extract_strided_slice %3 {offsets = [1, 0, 0], sizes = [1, 8, 8], strides = [1, 1, 1]} : vector<2x8x8xf32> to vector<1x8x8xf32>
    %77 = vector.shape_cast %76 : vector<1x8x8xf32> to vector<8x8xf32>
    %cst_30 = arith.constant 0.000000e+00 : f32
    %78 = vector.broadcast %cst_30 : f32 to vector<8x8xf32>
    %79 = arith.cmpf one, %77, %78 : vector<8x8xf32>
    %cst_31 = arith.constant -1.000000e+02 : f32
    %80 = vector.broadcast %cst_31 : f32 to vector<8x8xf32>
    %81 = arith.select %79, %75, %80 : vector<8x8xi1>, vector<8x8xf32>
    %cst_32 = arith.constant dense<0xFF800000> : vector<8xf32>
    %82 = vector.multi_reduction <maximumf>, %81, %cst_32 [1] : vector<8x8xf32> to vector<8xf32>
    %83 = vector.shape_cast %82 : vector<8xf32> to vector<8x1xf32>
    %84 = vector.broadcast %83 : vector<8x1xf32> to vector<8x8xf32>
    %85 = arith.subf %81, %84 : vector<8x8xf32>
    %86 = math.exp %85 : vector<8x8xf32>
    %cst_33 = arith.constant dense<0.000000e+00> : vector<8xf32>
    %87 = vector.multi_reduction <add>, %86, %cst_33 [1] : vector<8x8xf32> to vector<8xf32>
    %88 = vector.shape_cast %87 : vector<8xf32> to vector<8x1xf32>
    %89 = tpu.reciprocal %88 : vector<8x1xf32> -> vector<8x1xf32>
    %90 = vector.broadcast %89 : vector<8x1xf32> to vector<8x8xf32>
    %91 = arith.mulf %86, %90 : vector<8x8xf32>
    %cst_34 = arith.constant 0.000000e+00 : f32
    %92 = vector.broadcast %cst_34 : f32 to vector<8x8xf32>
    %93 = arith.cmpf ogt, %77, %92 : vector<8x8xf32>
    %cst_35 = arith.constant 0.000000e+00 : f32
    %94 = vector.broadcast %cst_35 : f32 to vector<8x8xf32>
    %95 = arith.select %93, %91, %94 : vector<8x8xi1>, vector<8x8xf32>
    %96 = vector.extract_strided_slice %13 {offsets = [1, 0, 0], sizes = [1, 8, 32], strides = [1, 1, 1]} : vector<2x8x32xf32> to vector<1x8x32xf32>
    %97 = vector.shape_cast %96 : vector<1x8x32xf32> to vector<8x32xf32>
    %cst_36 = arith.constant dense<0.000000e+00> : vector<8x32xf32>
    %98 = tpu.matmul %95, %97, %cst_36 {dimension_numbers = #tpu.dot_dimension_numbers<[1], [0], [0], [1], [0, 0, 1, 1], [], []>} : vector<8x8xf32>, vector<8x32xf32>, vector<8x32xf32> -> vector<8x32xf32>
    %99 = vector.extract_strided_slice %0 {offsets = [1, 0, 0], sizes = [1, 8, 32], strides = [1, 1, 1]} : vector<2x8x32xf32> to vector<1x8x32xf32>
    %100 = vector.shape_cast %99 : vector<1x8x32xf32> to vector<8x32xf32>
    %101 = arith.addf %100, %98 : vector<8x32xf32>
    %cst_37 = arith.constant 0.000000e+00 : f32
    %102 = vector.broadcast %cst_37 : f32 to vector<8x32xf32>
    %103 = arith.maximumf %101, %102 : vector<8x32xf32>
    %c1 = arith.constant 1 : index
    %c0_38 = arith.constant 0 : index
    %c0_39 = arith.constant 0 : index
    %104 = vector.load %arg8[%c1, %c0_38, %c0_39] : memref<2x8x32xf32, #tpu.memory_space<vmem>>, vector<1x8x32xf32>
    %105 = vector.shape_cast %104 : vector<1x8x32xf32> to vector<8x32xf32>
    %106 = vector.shape_cast %103 : vector<8x32xf32> to vector<1x8x32xf32>
    tpu.vector_store %arg8[%c1, %c0_38, %c0_39], %106 {strides = array<i32>} : memref<2x8x32xf32, #tpu.memory_space<vmem>>, vector<1x8x32xf32>,
    return
  }
  func.func @transform_0(%arg0: i32, %arg1: i32) -> (i32, i32, i32) {
    %c0_i32 = arith.constant 0 : i32
    %c0_i32_0 = arith.constant 0 : i32
    return %arg0, %arg1, %c0_i32 : i32, i32, i32
  }
  func.func @transform_1(%arg0: i32, %arg1: i32) -> (i32, i32, i32) {
    %c0_i32 = arith.constant 0 : i32
    %c0_i32_0 = arith.constant 0 : i32
    %c0_i32_1 = arith.constant 0 : i32
    return %arg0, %c0_i32, %c0_i32_0 : i32, i32, i32
  }
  func.func @transform_2(%arg0: i32, %arg1: i32) -> (i32, i32, i32) {
    %c0_i32 = arith.constant 0 : i32
    %c0_i32_0 = arith.constant 0 : i32
    return %arg0, %arg1, %c0_i32 : i32, i32, i32
  }
  func.func @transform_3(%arg0: i32, %arg1: i32) -> (i32, i32) {
    %c0_i32 = arith.constant 0 : i32
    %c0_i32_0 = arith.constant 0 : i32
    %c0_i32_1 = arith.constant 0 : i32
    return %c0_i32, %c0_i32_0 : i32, i32
  }
  func.func @transform_4(%arg0: i32, %arg1: i32) -> (i32, i32) {
    %c0_i32 = arith.constant 0 : i32
    %c0_i32_0 = arith.constant 0 : i32
    %c0_i32_1 = arith.constant 0 : i32
    return %c0_i32, %c0_i32_0 : i32, i32
  }
  func.func @transform_5(%arg0: i32, %arg1: i32) -> (i32, i32) {
    %c0_i32 = arith.constant 0 : i32
    %c0_i32_0 = arith.constant 0 : i32
    %c0_i32_1 = arith.constant 0 : i32
    return %c0_i32, %c0_i32_0 : i32, i32
  }
  func.func @transform_6(%arg0: i32, %arg1: i32) -> (i32, i32, i32) {
    %c0_i32 = arith.constant 0 : i32
    %c0_i32_0 = arith.constant 0 : i32
    return %arg0, %arg1, %c0_i32 : i32, i32, i32
  }
}

</mosaic_0001>

<llo_original>
// kernel: tpu_custom_call.1
$region0: #{tpu_custom_call.1}
  #allocation0 [shape = 'u32[]', space=smem, size = 0x4, offset = 0x4, fixed_abs, tag = 'smem constant byte address 0x4 - core index']
  #allocation1 [shape = 'u32[144,128]{1,0:T(1,128)}', space=vmem, size = 0x12000, scoped, tag = 'internal scratch']
  %s0 = inlined_call_operand.hbm [shape: f32[2,8,32], index: 0, kind: input, shape index: {}]
  %s1 = inlined_call_operand.hbm [shape: f32[2,8,32], index: 1, kind: input, shape index: {}]
  %s2 = inlined_call_operand.vmem [shape: s8[2,8,8], index: 2, kind: input, shape index: {}]
  %s3 = inlined_call_operand.hbm [shape: f32[32,32], index: 3, kind: input, shape index: {}]
  %s4 = inlined_call_operand.hbm [shape: f32[32,64], index: 4, kind: input, shape index: {}]
  %s5 = inlined_call_operand.vmem [shape: f32[1,32], index: 5, kind: input, shape index: {}]
  %s6 = inlined_call_operand.hbm [shape: f32[2,8,32], index: 6, kind: output, shape index: {}]
  %s7 = sld [smem:[#allocation0]]
  $region50: #{tpu_custom_call.1} parent=0
    _
  %s9 = ssub.s32 1, %s7
  %s10 = scalar_select 0, %s9, %s7
  $region1: #{tpu_custom_call.1} parent=0
    #allocation2 [shape = 'u8[8192]{0}', space=vmem, size = 0x2000, scoped, tag = 'input window, operand 0, single buffered']
    #allocation3 [shape = 's32[1]{0}', space=sflag, size = 0x4, scoped, tag = 'scoped memory for tpu_custom_call.1']
    #allocation4 [shape = 's32[1]{0}', space=sflag, size = 0x4, scoped, tag = 'scoped memory for tpu_custom_call.1']
    #allocation5 [shape = 'u8[8192]{0}', space=vmem, size = 0x2000, scoped, tag = 'input window, operand 1, single buffered']
    #allocation6 [shape = 's32[1]{0}', space=sflag, size = 0x4, scoped, tag = 'scoped memory for tpu_custom_call.1']
    #allocation7 [shape = 'u8[16384]{0}', space=vmem, size = 0x4000, scoped, tag = 'input window, operand 3, single buffered']
    #allocation8 [shape = 'u8[16384]{0}', space=vmem, size = 0x4000, scoped, tag = 'input window, operand 4, single buffered']
    #allocation9 [shape = 's32[1]{0}', space=sflag, size = 0x4, scoped, tag = 'scoped memory for tpu_custom_call.1']
    #allocation10 [shape = 'u8[8192]{0}', space=vmem, size = 0x2000, scoped, tag = 'output window, operand 0, single buffered']
    %11 = vsyncpa [#allocation3], 0
    %12 = vsyncpa [#allocation6], 0
    %13 = vsyncpa [#allocation9], 0
    %14 = vsyncpa [#allocation4], 0
    // Predicated region
    $region2: #{tpu_custom_call.1} parent=1 // pred_check
      _
    $region3: #{tpu_custom_call.1} parent=1 // pred_check_branch
      %16 = sbr.rel (0) target = $region5
    $region4: #{tpu_custom_call.1} parent=1 // pred_region
      %s18 = ssub.s32 256, 256
      %19 = vsyncadd [#allocation3], %s18
      %s20 = sshll.u32 [#allocation2], 4
      %s21 = int_to_ptr.vmem [resolvable:$true] %s20
      %26 = dma.hbm_to_vmem [thread:$0]  %s0, 256, %s21, [#allocation3], 128, 128, 8
    $region5: #{tpu_custom_call.1} parent=1 // pred_fallthru
      _
    // Predicated region
    $region6: #{tpu_custom_call.1} parent=1 // pred_check
      _
    $region7: #{tpu_custom_call.1} parent=1 // pred_check_branch
      %28 = sbr.rel (0) target = $region9
    $region8: #{tpu_custom_call.1} parent=1 // pred_region
      %s30 = ssub.s32 256, 256
      %31 = vsyncadd [#allocation6], %s30
      %s32 = sshll.u32 [#allocation5], 4
      %s33 = int_to_ptr.vmem [resolvable:$true] %s32
      %38 = dma.hbm_to_vmem [thread:$0]  %s1, 256, %s33, [#allocation6], 128, 128, 8
    $region9: #{tpu_custom_call.1} parent=1 // pred_fallthru
      _
    // Predicated region
    $region10: #{tpu_custom_call.1} parent=1 // pred_check
      _
    $region11: #{tpu_custom_call.1} parent=1 // pred_check_branch
      %40 = sbr.rel (0) target = $region13
    $region12: #{tpu_custom_call.1} parent=1 // pred_region
      _
    $region13: #{tpu_custom_call.1} parent=1 // pred_fallthru
      _
    // Predicated region
    $region14: #{tpu_custom_call.1} parent=1 // pred_check
      _
    $region15: #{tpu_custom_call.1} parent=1 // pred_check_branch
      %42 = sbr.rel (0) target = $region17
    $region16: #{tpu_custom_call.1} parent=1 // pred_region
      %s44 = ssub.s32 512, 512
      %45 = vsyncadd [#allocation6], %s44
      %s46 = sshll.u32 [#allocation7], 4
      %s47 = int_to_ptr.vmem [resolvable:$true] %s46
      %52 = dma.hbm_to_vmem [thread:$0]  %s3, 512, %s47, [#allocation6], 128, 128, 8
    $region17: #{tpu_custom_call.1} parent=1 // pred_fallthru
      _
    // Predicated region
    $region18: #{tpu_custom_call.1} parent=1 // pred_check
      _
    $region19: #{tpu_custom_call.1} parent=1 // pred_check_branch
      %54 = sbr.rel (0) target = $region21
    $region20: #{tpu_custom_call.1} parent=1 // pred_region
      %s56 = ssub.s32 512, 512
      %57 = vsyncadd [#allocation9], %s56
      %s58 = sshll.u32 [#allocation8], 4
      %s59 = int_to_ptr.vmem [resolvable:$true] %s58
      %64 = dma.hbm_to_vmem [thread:$0]  %s4, 512, %s59, [#allocation9], 128, 128, 8
    $region21: #{tpu_custom_call.1} parent=1 // pred_fallthru
      _
    // Predicated region
    $region22: #{tpu_custom_call.1} parent=1 // pred_check
      _
    $region23: #{tpu_custom_call.1} parent=1 // pred_check_branch
      %66 = sbr.rel (0) target = $region25
    $region24: #{tpu_custom_call.1} parent=1 // pred_region
      _
    $region25: #{tpu_custom_call.1} parent=1 // pred_fallthru
      _
    // Predicated region
    $region26: #{tpu_custom_call.1} parent=1 // pred_check
      _
    $region27: #{tpu_custom_call.1} parent=1 // pred_check_branch
      %68 = sbr.rel (0) target = $region29
    $region28: #{tpu_custom_call.1} parent=1 // pred_region
      %69 = dma.done [#allocation3], 256
    $region29: #{tpu_custom_call.1} parent=1 // pred_fallthru
      _
    // Predicated region
    $region30: #{tpu_custom_call.1} parent=1 // pred_check
      _
    $region31: #{tpu_custom_call.1} parent=1 // pred_check_branch
      %71 = sbr.rel (0) target = $region33
    $region32: #{tpu_custom_call.1} parent=1 // pred_region
      %72 = dma.done [#allocation6], 256
    $region33: #{tpu_custom_call.1} parent=1 // pred_fallthru
      _
    // Predicated region
    $region34: #{tpu_custom_call.1} parent=1 // pred_check
      _
    $region35: #{tpu_custom_call.1} parent=1 // pred_check_branch
      %74 = sbr.rel (0) target = $region37
    $region36: #{tpu_custom_call.1} parent=1 // pred_region
      %75 = dma.done [#allocation6], 512
    $region37: #{tpu_custom_call.1} parent=1 // pred_fallthru
      _
    // Predicated region
    $region38: #{tpu_custom_call.1} parent=1 // pred_check
      _
    $region39: #{tpu_custom_call.1} parent=1 // pred_check_branch
      %77 = sbr.rel (0) target = $region41
    $region40: #{tpu_custom_call.1} parent=1 // pred_region
      %78 = dma.done [#allocation9], 512
    $region41: #{tpu_custom_call.1} parent=1 // pred_fallthru
      _
    %v79 = vld [vmem:[#allocation2] sm:$0xff]
    %v80 = vld [vmem:[#allocation2 + $0x8] sm:$0xff]
    %v81 = vld [vmem:[#allocation5] sm:$0xff]
    %v82 = vld [vmem:[#allocation5 + $0x8] sm:$0xff]
    %v83 = vld [vmem:[%s2] sm:$0x3]
    %v84 = vld [vmem:[%s2 + $0x2] sm:$0x3]
    %v85 = vunpack.c.0.s8 %v83
    %v86 = vunpack.c.0.s8 %v84
    %v87 = vcvt.s32.f32 %v85
    %v88 = vcvt.s32.f32 %v86
    %v89 = vld [vmem:[#allocation7] sm:$0xff]
    %v90 = vld [vmem:[#allocation7 + $0x8] sm:$0xff]
    %v91 = vld [vmem:[#allocation7 + $0x10] sm:$0xff]
    %v92 = vld [vmem:[#allocation7 + $0x18] sm:$0xff]
    %vm93 = vcmask 261120
    %v95 = vsel %vm93, %v79, 0
    %v98 = vsel %vm93, %v80, 0
    %100 = vmatprep.subr.mxu0 0.0
    %101 = vmatpush1.msra.mxu0 %v89
    %102 = vmatprep.subr.mxu0 0.0
    %103 = vmatpush1.msra.mxu0 %v90
    %104 = vmatprep.subr.mxu0 0.0
    %105 = vmatpush1.msra.mxu0 %v91
    %106 = vmatprep.subr.mxu0 0.0
    %107 = vmatpush1.msra.mxu0 %v92
    %108 = vmatprep.subr.mxu0 0.0
    %109 = vmatpush1.msra.mxu0 0.0
    %110 = vmatprep.subr.mxu0 0.0
    %111 = vmatpush1.msra.mxu0 0.0
    %112 = vmatprep.subr.mxu0 0.0
    %113 = vmatpush1.msra.mxu0 0.0
    %114 = vmatprep.subr.mxu0 0.0
    %115 = vmatpush1.msra.mxu0 0.0
    %116 = vmatprep.subr.mxu0 0.0
    %117 = vmatpush1.msra.mxu0 0.0
    %118 = vmatprep.subr.mxu0 0.0
    %119 = vmatpush1.msra.mxu0 0.0
    %120 = vmatprep.subr.mxu0 0.0
    %121 = vmatpush1.msra.mxu0 0.0
    %122 = vmatprep.subr.mxu0 0.0
    %123 = vmatpush1.msra.mxu0 0.0
    %124 = vmatprep.subr.mxu0 0.0
    %125 = vmatpush1.msra.mxu0 0.0
    %126 = vmatprep.subr.mxu0 0.0
    %127 = vmatpush1.msra.mxu0 0.0
    %128 = vmatprep.subr.mxu0 0.0
    %129 = vmatpush1.msra.mxu0 0.0
    %130 = vmatprep.subr.mxu0 0.0
    %131 = vmatpush1.msra.mxu0 0.0
    %132 = vmatprep.subr.mxu0 0.0
    %133 = vmatpush1.msra.mxu0 0.0
    %134 = vmatprep.subr.mxu0 0.0
    %135 = vmatpush1.msra.mxu0 0.0
    %136 = vmatprep.subr.mxu0 0.0
    %137 = vmatpush1.msra.mxu0 0.0
    %138 = vmatprep.subr.mxu0 0.0
    %139 = vmatpush1.msra.mxu0 0.0
    %140 = vmatprep.subr.mxu0 0.0
    %141 = vmatpush1.msra.mxu0 0.0
    %142 = vmatprep.subr.mxu0 0.0
    %143 = vmatpush1.msra.mxu0 0.0
    %144 = vmatprep.subr.mxu0 0.0
    %145 = vmatpush1.msra.mxu0 0.0
    %146 = vmatprep.subr.mxu0 0.0
    %147 = vmatpush1.msra.mxu0 0.0
    %148 = vmatprep.subr.mxu0 0.0
    %149 = vmatpush1.msra.mxu0 0.0
    %150 = vmatprep.subr.mxu0 0.0
    %151 = vmatpush1.msra.mxu0 0.0
    %152 = vmatprep.subr.mxu0 0.0
    %153 = vmatpush1.msra.mxu0 0.0
    %154 = vmatprep.subr.mxu0 0.0
    %155 = vmatpush1.msra.mxu0 0.0
    %156 = vmatprep.subr.mxu0 0.0
    %157 = vmatpush1.msra.mxu0 0.0
    %158 = vmatprep.subr.mxu0 0.0
    %159 = vmatpush1.msra.mxu0 0.0
    %160 = vmatprep.subr.mxu0 0.0
    %161 = vmatpush1.msra.mxu0 0.0
    %162 = vmatprep.subr.mxu0 0.0
    %163 = vmatpush1.msra.mxu0 0.0
    %164 = vmatprep.mubr.f32.mxu0 0.0
    %165 = vmatmul.mubr.f32.gmra.mrb[0].mxu0 %v95
    %v166 = vpop.f32.mrb[0].mxu0
    %v167 = vadd.f32 0.0, %v166
    %v168 = vpop.f32.mrb[0].mxu0
    %169 = vmatprep.mubr.f32.mxu0 0.0
    %170 = vmatmul.mubr.f32.gmra.mrb[0].mxu0 %v98
    %v171 = vpop.f32.mrb[0].mxu0
    %v172 = vadd.f32 0.0, %v171
    %v173 = vpop.f32.mrb[0].mxu0
    %174 = vdwg.mxu0
    %v175 = vld [vmem:[#allocation8] sm:$0xff]
    %v176 = vld [vmem:[#allocation8 + $0x8] sm:$0xff]
    %v177 = vld [vmem:[#allocation8 + $0x10] sm:$0xff]
    %v178 = vld [vmem:[#allocation8 + $0x18] sm:$0xff]
    %v180 = vsel %vm93, %v81, 0
    %v183 = vsel %vm93, %v82, 0
    %185 = vmatprep.subr.mxu0 0.0
    %186 = vmatpush1.msra.mxu0 %v175
    %187 = vmatprep.subr.mxu0 0.0
    %188 = vmatpush1.msra.mxu0 %v176
    %189 = vmatprep.subr.mxu0 0.0
    %190 = vmatpush1.msra.mxu0 %v177
    %191 = vmatprep.subr.mxu0 0.0
    %192 = vmatpush1.msra.mxu0 %v178
    %193 = vmatprep.subr.mxu0 0.0
    %194 = vmatpush1.msra.mxu0 0.0
    %195 = vmatprep.subr.mxu0 0.0
    %196 = vmatpush1.msra.mxu0 0.0
    %197 = vmatprep.subr.mxu0 0.0
    %198 = vmatpush1.msra.mxu0 0.0
    %199 = vmatprep.subr.mxu0 0.0
    %200 = vmatpush1.msra.mxu0 0.0
    %201 = vmatprep.subr.mxu0 0.0
    %202 = vmatpush1.msra.mxu0 0.0
    %203 = vmatprep.subr.mxu0 0.0
    %204 = vmatpush1.msra.mxu0 0.0
    %205 = vmatprep.subr.mxu0 0.0
    %206 = vmatpush1.msra.mxu0 0.0
    %207 = vmatprep.subr.mxu0 0.0
    %208 = vmatpush1.msra.mxu0 0.0
    %209 = vmatprep.subr.mxu0 0.0
    %210 = vmatpush1.msra.mxu0 0.0
    %211 = vmatprep.subr.mxu0 0.0
    %212 = vmatpush1.msra.mxu0 0.0
    %213 = vmatprep.subr.mxu0 0.0
    %214 = vmatpush1.msra.mxu0 0.0
    %215 = vmatprep.subr.mxu0 0.0
    %216 = vmatpush1.msra.mxu0 0.0
    %217 = vmatprep.subr.mxu0 0.0
    %218 = vmatpush1.msra.mxu0 0.0
    %219 = vmatprep.subr.mxu0 0.0
    %220 = vmatpush1.msra.mxu0 0.0
    %221 = vmatprep.subr.mxu0 0.0
    %222 = vmatpush1.msra.mxu0 0.0
    %223 = vmatprep.subr.mxu0 0.0
    %224 = vmatpush1.msra.mxu0 0.0
    %225 = vmatprep.subr.mxu0 0.0
    %226 = vmatpush1.msra.mxu0 0.0
    %227 = vmatprep.subr.mxu0 0.0
    %228 = vmatpush1.msra.mxu0 0.0
    %229 = vmatprep.subr.mxu0 0.0
    %230 = vmatpush1.msra.mxu0 0.0
    %231 = vmatprep.subr.mxu0 0.0
    %232 = vmatpush1.msra.mxu0 0.0
    %233 = vmatprep.subr.mxu0 0.0
    %234 = vmatpush1.msra.mxu0 0.0
    %235 = vmatprep.subr.mxu0 0.0
    %236 = vmatpush1.msra.mxu0 0.0
    %237 = vmatprep.subr.mxu0 0.0
    %238 = vmatpush1.msra.mxu0 0.0
    %239 = vmatprep.subr.mxu0 0.0
    %240 = vmatpush1.msra.mxu0 0.0
    %241 = vmatprep.subr.mxu0 0.0
    %242 = vmatpush1.msra.mxu0 0.0
    %243 = vmatprep.subr.mxu0 0.0
    %244 = vmatpush1.msra.mxu0 0.0
    %245 = vmatprep.subr.mxu0 0.0
    %246 = vmatpush1.msra.mxu0 0.0
    %247 = vmatprep.subr.mxu0 0.0
    %248 = vmatpush1.msra.mxu0 0.0
    %249 = vmatprep.mubr.f32.mxu0 0.0
    %250 = vmatmul.mubr.f32.gmra.mrb[0].mxu0 %v180
    %v251 = vpop.f32.mrb[0].mxu0
    %v252 = vadd.f32 0.0, %v251
    %v253 = vpop.f32.mrb[0].mxu0
    %254 = vmatprep.mubr.f32.mxu0 0.0
    %255 = vmatmul.mubr.f32.gmra.mrb[0].mxu0 %v183
    %v256 = vpop.f32.mrb[0].mxu0
    %v257 = vadd.f32 0.0, %v256
    %v258 = vpop.f32.mrb[0].mxu0
    %259 = vdwg.mxu0
    %v260 = vld [vmem:[%s5] sm:$0x1]
    %v262 = vcombine.high %v167, %v167
    %v264 = vunpack.c.l.s4 1966171168
    %v265 = vunpack.c.0.s8 %v264
    %v266 = vlaneseq
    %v267 = vshrl.u32 %v266, 7
    %v268 = vsub.s32 %v265, %v267
    %v269 = vrot.slane %v167, %v268
    %v271 = vunpack.c.l.s4 1966171168
    %v272 = vunpack.c.0.s8 %v271
    %v273 = vlaneseq
    %v274 = vshrl.u32 %v273, 7
    %v275 = vsub.s32 %v272, %v274
    %v276 = vrot.slane %v262, %v275
    %v277 = vcombine.high %v269, %v269
    %v278 = vcombine.high %v276, %v276
    %v280 = vunpack.c.l.s4 1966171168
    %v281 = vunpack.c.0.s8 %v280
    %v282 = vlaneseq
    %v283 = vshrl.u32 %v282, 7
    %v284 = vsub.s32 %v281, %v283
    %v285 = vrot.slane %v269, %v284
    %v287 = vunpack.c.l.s4 1966171168
    %v288 = vunpack.c.0.s8 %v287
    %v289 = vlaneseq
    %v290 = vshrl.u32 %v289, 7
    %v291 = vsub.s32 %v288, %v290
    %v292 = vrot.slane %v276, %v291
    %v294 = vunpack.c.l.s4 1966171168
    %v295 = vunpack.c.0.s8 %v294
    %v296 = vlaneseq
    %v297 = vshrl.u32 %v296, 7
    %v298 = vsub.s32 %v295, %v297
    %v299 = vrot.slane %v277, %v298
    %v301 = vunpack.c.l.s4 1966171168
    %v302 = vunpack.c.0.s8 %v301
    %v303 = vlaneseq
    %v304 = vshrl.u32 %v303, 7
    %v305 = vsub.s32 %v302, %v304
    %v306 = vrot.slane %v278, %v305
    %v307 = vcombine.high %v285, %v285
    %v308 = vcombine.high %v292, %v292
    %v309 = vcombine.high %v299, %v299
    %v310 = vcombine.high %v306, %v306
    %v311 = vlaneseq
    %v312 = vshrl.u32 %v311, 7
    %v313 = vsub.s32 0, %v312
    %v314 = vrot.slane %v285, %v313
    %v315 = vlaneseq
    %v316 = vshrl.u32 %v315, 7
    %v317 = vsub.s32 0, %v316
    %v318 = vrot.slane %v299, %v317
    %v319 = vlaneseq
    %v320 = vshrl.u32 %v319, 7
    %v321 = vsub.s32 0, %v320
    %v322 = vrot.slane %v307, %v321
    %v323 = vlaneseq
    %v324 = vshrl.u32 %v323, 7
    %v325 = vsub.s32 0, %v324
    %v326 = vrot.slane %v309, %v325
    %v327 = vlaneseq
    %v328 = vshrl.u32 %v327, 7
    %v329 = vsub.s32 0, %v328
    %v330 = vrot.slane %v292, %v329
    %v331 = vlaneseq
    %v332 = vshrl.u32 %v331, 7
    %v333 = vsub.s32 0, %v332
    %v334 = vrot.slane %v306, %v333
    %v335 = vlaneseq
    %v336 = vshrl.u32 %v335, 7
    %v337 = vsub.s32 0, %v336
    %v338 = vrot.slane %v308, %v337
    %v339 = vlaneseq
    %v340 = vshrl.u32 %v339, 7
    %v341 = vsub.s32 0, %v340
    %v342 = vrot.slane %v310, %v341
    %v351 = vadd.f32 %v314, %v252
    %v352 = vadd.f32 %v318, %v252
    %v353 = vadd.f32 %v322, %v252
    %v354 = vadd.f32 %v326, %v252
    %v355 = vadd.f32 %v330, %v252
    %v356 = vadd.f32 %v334, %v252
    %v357 = vadd.f32 %v338, %v252
    %v358 = vadd.f32 %v342, %v252
    %v359 = vmax.f32 %v351, 0.0
    %v360 = vmax.f32 %v352, 0.0
    %v361 = vmax.f32 %v353, 0.0
    %v362 = vmax.f32 %v354, 0.0
    %v363 = vmax.f32 %v355, 0.0
    %v364 = vmax.f32 %v356, 0.0
    %v365 = vmax.f32 %v357, 0.0
    %v366 = vmax.f32 %v358, 0.0
    %v368 = vlaneseq
    %v369 = vshrl.u32 %v368, 7
    %v370 = vsub.s32 0, %v369
    %v371 = vrot.slane %v260, %v370
    %v373 = vmul.f32 %v359, %v371
    %v374 = vmul.f32 %v360, %v371
    %v375 = vmul.f32 %v361, %v371
    %v376 = vmul.f32 %v362, %v371
    %v377 = vmul.f32 %v363, %v371
    %v378 = vmul.f32 %v364, %v371
    %v379 = vmul.f32 %v365, %v371
    %v380 = vmul.f32 %v366, %v371
    %v381 = vsel %vm93, %v373, 0.0
    %382 = vadd.xlane.f32.xlu0 %v381
    %v383 = vpop.xlane.xlu0 %382
    %v384 = vsel %vm93, %v374, 0.0
    %385 = vadd.xlane.f32.xlu0 %v384
    %v386 = vpop.xlane.xlu0 %385
    %v387 = vsel %vm93, %v375, 0.0
    %388 = vadd.xlane.f32.xlu0 %v387
    %v389 = vpop.xlane.xlu0 %388
    %v390 = vsel %vm93, %v376, 0.0
    %391 = vadd.xlane.f32.xlu0 %v390
    %v392 = vpop.xlane.xlu0 %391
    %v393 = vsel %vm93, %v377, 0.0
    %394 = vadd.xlane.f32.xlu0 %v393
    %v395 = vpop.xlane.xlu0 %394
    %v396 = vsel %vm93, %v378, 0.0
    %397 = vadd.xlane.f32.xlu0 %v396
    %v398 = vpop.xlane.xlu0 %397
    %v399 = vsel %vm93, %v379, 0.0
    %400 = vadd.xlane.f32.xlu0 %v399
    %v401 = vpop.xlane.xlu0 %400
    %v402 = vsel %vm93, %v380, 0.0
    %403 = vadd.xlane.f32.xlu0 %v402
    %v404 = vpop.xlane.xlu0 %403
    %vm405 = vcmp.ne.f32.partialorder %v87, 0.0
    %v414 = vlaneseq
    %v415 = vand.u32 %v414, 127
    %v416 = vlaneseq
    %v417 = vshrl.u32 %v416, 7
    %v418 = vsub.s32 %v415, %v417
    %v419 = vrot.slane %v383, %v418
    %v420 = vlaneseq
    %v421 = vshrl.u32 %v420, 7
    %v422 = vsub.s32 %v415, %v421
    %v423 = vrot.slane %v386, %v422
    %v424 = vlaneseq
    %v425 = vshrl.u32 %v424, 7
    %v426 = vsub.s32 %v415, %v425
    %v427 = vrot.slane %v389, %v426
    %v428 = vlaneseq
    %v429 = vshrl.u32 %v428, 7
    %v430 = vsub.s32 %v415, %v429
    %v431 = vrot.slane %v392, %v430
    %v432 = vlaneseq
    %v433 = vshrl.u32 %v432, 7
    %v434 = vsub.s32 %v415, %v433
    %v435 = vrot.slane %v395, %v434
    %v436 = vlaneseq
    %v437 = vshrl.u32 %v436, 7
    %v438 = vsub.s32 %v415, %v437
    %v439 = vrot.slane %v398, %v438
    %v440 = vlaneseq
    %v441 = vshrl.u32 %v440, 7
    %v442 = vsub.s32 %v415, %v441
    %v443 = vrot.slane %v401, %v442
    %v444 = vlaneseq
    %v445 = vshrl.u32 %v444, 7
    %v446 = vsub.s32 %v415, %v445
    %v447 = vrot.slane %v404, %v446
    %vm448 = vcmask 1041409
    %v449 = vsel %vm448, %v423, %v419
    %vm450 = vcmask 1042434
    %v451 = vsel %vm450, %v427, %v449
    %vm452 = vcmask 1043459
    %v453 = vsel %vm452, %v431, %v451
    %vm454 = vcmask 1044484
    %v455 = vsel %vm454, %v435, %v453
    %vm456 = vcmask 1045509
    %v457 = vsel %vm456, %v439, %v455
    %vm458 = vcmask 1046534
    %v459 = vsel %vm458, %v443, %v457
    %vm460 = vcmask 1047559
    %v461 = vsel %vm460, %v447, %v459
    %v463 = vsel %vm405, %v461, -100.0
    %vm464 = vcmask 64512
    %v465 = vsel %vm464, %v463, -inf
    %466 = vmax.xlane.f32.xlu0 %v465
    %v467 = vpop.xlane.xlu0 %466
    %v468 = vsub.f32 %v463, %v467
    %v469 = vmul.f32 %v468, 1.442695
    %v470 = vpow.pop %v469
    %v471 = vsel %vm464, %v470, 0.0
    %472 = vadd.xlane.f32.xlu0 %v471
    %v473 = vpop.xlane.xlu0 %472
    %v474 = vrcp.pop %v473
    %v475 = vmul.f32 %v470, %v474
    %vm476 = vcmp.gt.f32.partialorder %v87, 0.0
    %v477 = vsel %vm476, %v475, 0.0
    %479 = vrot.lane.b32.xlu0 %v252, 96
    %v480 = vpop.permute.xlu0 %479
    %v483 = vsel %vm464, %v477, 0
    %485 = vmatprep.subr.mxu0 0.0
    %486 = vmatpush1.msra.mxu0 %v480
    %487 = vmatprep.subr.mxu0 0.0
    %488 = vmatpush1.msra.mxu0 0.0
    %489 = vmatprep.subr.mxu0 0.0
    %490 = vmatpush1.msra.mxu0 0.0
    %491 = vmatprep.subr.mxu0 0.0
    %492 = vmatpush1.msra.mxu0 0.0
    %493 = vmatprep.subr.mxu0 0.0
    %494 = vmatpush1.msra.mxu0 0.0
    %495 = vmatprep.subr.mxu0 0.0
    %496 = vmatpush1.msra.mxu0 0.0
    %497 = vmatprep.subr.mxu0 0.0
    %498 = vmatpush1.msra.mxu0 0.0
    %499 = vmatprep.subr.mxu0 0.0
    %500 = vmatpush1.msra.mxu0 0.0
    %501 = vmatprep.subr.mxu0 0.0
    %502 = vmatpush1.msra.mxu0 0.0
    %503 = vmatprep.subr.mxu0 0.0
    %504 = vmatpush1.msra.mxu0 0.0
    %505 = vmatprep.subr.mxu0 0.0
    %506 = vmatpush1.msra.mxu0 0.0
    %507 = vmatprep.subr.mxu0 0.0
    %508 = vmatpush1.msra.mxu0 0.0
    %509 = vmatprep.subr.mxu0 0.0
    %510 = vmatpush1.msra.mxu0 0.0
    %511 = vmatprep.subr.mxu0 0.0
    %512 = vmatpush1.msra.mxu0 0.0
    %513 = vmatprep.subr.mxu0 0.0
    %514 = vmatpush1.msra.mxu0 0.0
    %515 = vmatprep.subr.mxu0 0.0
    %516 = vmatpush1.msra.mxu0 0.0
    %517 = vmatprep.subr.mxu0 0.0
    %518 = vmatpush1.msra.mxu0 0.0
    %519 = vmatprep.subr.mxu0 0.0
    %520 = vmatpush1.msra.mxu0 0.0
    %521 = vmatprep.subr.mxu0 0.0
    %522 = vmatpush1.msra.mxu0 0.0
    %523 = vmatprep.subr.mxu0 0.0
    %524 = vmatpush1.msra.mxu0 0.0
    %525 = vmatprep.subr.mxu0 0.0
    %526 = vmatpush1.msra.mxu0 0.0
    %527 = vmatprep.subr.mxu0 0.0
    %528 = vmatpush1.msra.mxu0 0.0
    %529 = vmatprep.subr.mxu0 0.0
    %530 = vmatpush1.msra.mxu0 0.0
    %531 = vmatprep.subr.mxu0 0.0
    %532 = vmatpush1.msra.mxu0 0.0
    %533 = vmatprep.subr.mxu0 0.0
    %534 = vmatpush1.msra.mxu0 0.0
    %535 = vmatprep.subr.mxu0 0.0
    %536 = vmatpush1.msra.mxu0 0.0
    %537 = vmatprep.subr.mxu0 0.0
    %538 = vmatpush1.msra.mxu0 0.0
    %539 = vmatprep.subr.mxu0 0.0
    %540 = vmatpush1.msra.mxu0 0.0
    %541 = vmatprep.subr.mxu0 0.0
    %542 = vmatpush1.msra.mxu0 0.0
    %543 = vmatprep.subr.mxu0 0.0
    %544 = vmatpush1.msra.mxu0 0.0
    %545 = vmatprep.subr.mxu0 0.0
    %546 = vmatpush1.msra.mxu0 0.0
    %547 = vmatprep.subr.mxu0 0.0
    %548 = vmatpush1.msra.mxu0 0.0
    %549 = vmatprep.mubr.f32.mxu0 0.0
    %550 = vmatmul.mubr.f32.gmra.mrb[0].mxu0 %v483
    %v551 = vpop.f32.mrb[0].mxu0
    %v552 = vadd.f32 0.0, %v551
    %v553 = vpop.f32.mrb[0].mxu0
    %554 = vdwg.mxu0
    %v555 = vadd.f32 %v79, %v552
    %v556 = vmax.f32 %v555, 0.0
    %557 = vst.msk [vmem:[#allocation10] sm:$0xff] %vm93, %v556
    %v559 = vcombine.high %v172, %v172
    %v561 = vunpack.c.l.s4 1966171168
    %v562 = vunpack.c.0.s8 %v561
    %v563 = vlaneseq
    %v564 = vshrl.u32 %v563, 7
    %v565 = vsub.s32 %v562, %v564
    %v566 = vrot.slane %v172, %v565
    %v568 = vunpack.c.l.s4 1966171168
    %v569 = vunpack.c.0.s8 %v568
    %v570 = vlaneseq
    %v571 = vshrl.u32 %v570, 7
    %v572 = vsub.s32 %v569, %v571
    %v573 = vrot.slane %v559, %v572
    %v574 = vcombine.high %v566, %v566
    %v575 = vcombine.high %v573, %v573
    %v577 = vunpack.c.l.s4 1966171168
    %v578 = vunpack.c.0.s8 %v577
    %v579 = vlaneseq
    %v580 = vshrl.u32 %v579, 7
    %v581 = vsub.s32 %v578, %v580
    %v582 = vrot.slane %v566, %v581
    %v584 = vunpack.c.l.s4 1966171168
    %v585 = vunpack.c.0.s8 %v584
    %v586 = vlaneseq
    %v587 = vshrl.u32 %v586, 7
    %v588 = vsub.s32 %v585, %v587
    %v589 = vrot.slane %v573, %v588
    %v591 = vunpack.c.l.s4 1966171168
    %v592 = vunpack.c.0.s8 %v591
    %v593 = vlaneseq
    %v594 = vshrl.u32 %v593, 7
    %v595 = vsub.s32 %v592, %v594
    %v596 = vrot.slane %v574, %v595
    %v598 = vunpack.c.l.s4 1966171168
    %v599 = vunpack.c.0.s8 %v598
    %v600 = vlaneseq
    %v601 = vshrl.u32 %v600, 7
    %v602 = vsub.s32 %v599, %v601
    %v603 = vrot.slane %v575, %v602
    %v604 = vcombine.high %v582, %v582
    %v605 = vcombine.high %v589, %v589
    %v606 = vcombine.high %v596, %v596
    %v607 = vcombine.high %v603, %v603
    %v608 = vlaneseq
    %v609 = vshrl.u32 %v608, 7
    %v610 = vsub.s32 0, %v609
    %v611 = vrot.slane %v582, %v610
    %v612 = vlaneseq
    %v613 = vshrl.u32 %v612, 7
    %v614 = vsub.s32 0, %v613
    %v615 = vrot.slane %v596, %v614
    %v616 = vlaneseq
    %v617 = vshrl.u32 %v616, 7
    %v618 = vsub.s32 0, %v617
    %v619 = vrot.slane %v604, %v618
    %v620 = vlaneseq
    %v621 = vshrl.u32 %v620, 7
    %v622 = vsub.s32 0, %v621
    %v623 = vrot.slane %v606, %v622
    %v624 = vlaneseq
    %v625 = vshrl.u32 %v624, 7
    %v626 = vsub.s32 0, %v625
    %v627 = vrot.slane %v589, %v626
    %v628 = vlaneseq
    %v629 = vshrl.u32 %v628, 7
    %v630 = vsub.s32 0, %v629
    %v631 = vrot.slane %v603, %v630
    %v632 = vlaneseq
    %v633 = vshrl.u32 %v632, 7
    %v634 = vsub.s32 0, %v633
    %v635 = vrot.slane %v605, %v634
    %v636 = vlaneseq
    %v637 = vshrl.u32 %v636, 7
    %v638 = vsub.s32 0, %v637
    %v639 = vrot.slane %v607, %v638
    %v648 = vadd.f32 %v611, %v257
    %v649 = vadd.f32 %v615, %v257
    %v650 = vadd.f32 %v619, %v257
    %v651 = vadd.f32 %v623, %v257
    %v652 = vadd.f32 %v627, %v257
    %v653 = vadd.f32 %v631, %v257
    %v654 = vadd.f32 %v635, %v257
    %v655 = vadd.f32 %v639, %v257
    %v656 = vmax.f32 %v648, 0.0
    %v657 = vmax.f32 %v649, 0.0
    %v658 = vmax.f32 %v650, 0.0
    %v659 = vmax.f32 %v651, 0.0
    %v660 = vmax.f32 %v652, 0.0
    %v661 = vmax.f32 %v653, 0.0
    %v662 = vmax.f32 %v654, 0.0
    %v663 = vmax.f32 %v655, 0.0
    %v664 = vmul.f32 %v656, %v371
    %v665 = vmul.f32 %v657, %v371
    %v666 = vmul.f32 %v658, %v371
    %v667 = vmul.f32 %v659, %v371
    %v668 = vmul.f32 %v660, %v371
    %v669 = vmul.f32 %v661, %v371
    %v670 = vmul.f32 %v662, %v371
    %v671 = vmul.f32 %v663, %v371
    %v672 = vsel %vm93, %v664, 0.0
    %673 = vadd.xlane.f32.xlu0 %v672
    %v674 = vpop.xlane.xlu0 %673
    %v675 = vsel %vm93, %v665, 0.0
    %676 = vadd.xlane.f32.xlu0 %v675
    %v677 = vpop.xlane.xlu0 %676
    %v678 = vsel %vm93, %v666, 0.0
    %679 = vadd.xlane.f32.xlu0 %v678
    %v680 = vpop.xlane.xlu0 %679
    %v681 = vsel %vm93, %v667, 0.0
    %682 = vadd.xlane.f32.xlu0 %v681
    %v683 = vpop.xlane.xlu0 %682
    %v684 = vsel %vm93, %v668, 0.0
    %685 = vadd.xlane.f32.xlu0 %v684
    %v686 = vpop.xlane.xlu0 %685
    %v687 = vsel %vm93, %v669, 0.0
    %688 = vadd.xlane.f32.xlu0 %v687
    %v689 = vpop.xlane.xlu0 %688
    %v690 = vsel %vm93, %v670, 0.0
    %691 = vadd.xlane.f32.xlu0 %v690
    %v692 = vpop.xlane.xlu0 %691
    %v693 = vsel %vm93, %v671, 0.0
    %694 = vadd.xlane.f32.xlu0 %v693
    %v695 = vpop.xlane.xlu0 %694
    %vm696 = vcmp.ne.f32.partialorder %v88, 0.0
    %v705 = vlaneseq
    %v706 = vshrl.u32 %v705, 7
    %v707 = vsub.s32 %v415, %v706
    %v708 = vrot.slane %v674, %v707
    %v709 = vlaneseq
    %v710 = vshrl.u32 %v709, 7
    %v711 = vsub.s32 %v415, %v710
    %v712 = vrot.slane %v677, %v711
    %v713 = vlaneseq
    %v714 = vshrl.u32 %v713, 7
    %v715 = vsub.s32 %v415, %v714
    %v716 = vrot.slane %v680, %v715
    %v717 = vlaneseq
    %v718 = vshrl.u32 %v717, 7
    %v719 = vsub.s32 %v415, %v718
    %v720 = vrot.slane %v683, %v719
    %v721 = vlaneseq
    %v722 = vshrl.u32 %v721, 7
    %v723 = vsub.s32 %v415, %v722
    %v724 = vrot.slane %v686, %v723
    %v725 = vlaneseq
    %v726 = vshrl.u32 %v725, 7
    %v727 = vsub.s32 %v415, %v726
    %v728 = vrot.slane %v689, %v727
    %v729 = vlaneseq
    %v730 = vshrl.u32 %v729, 7
    %v731 = vsub.s32 %v415, %v730
    %v732 = vrot.slane %v692, %v731
    %v733 = vlaneseq
    %v734 = vshrl.u32 %v733, 7
    %v735 = vsub.s32 %v415, %v734
    %v736 = vrot.slane %v695, %v735
    %v737 = vsel %vm448, %v712, %v708
    %v738 = vsel %vm450, %v716, %v737
    %v739 = vsel %vm452, %v720, %v738
    %v740 = vsel %vm454, %v724, %v739
    %v741 = vsel %vm456, %v728, %v740
    %v742 = vsel %vm458, %v732, %v741
    %v743 = vsel %vm460, %v736, %v742
    %v745 = vsel %vm696, %v743, -100.0
    %v746 = vsel %vm464, %v745, -inf
    %747 = vmax.xlane.f32.xlu0 %v746
    %v748 = vpop.xlane.xlu0 %747
    %v749 = vsub.f32 %v745, %v748
    %v750 = vmul.f32 %v749, 1.442695
    %v751 = vpow.pop %v750
    %v752 = vsel %vm464, %v751, 0.0
    %753 = vadd.xlane.f32.xlu0 %v752
    %v754 = vpop.xlane.xlu0 %753
    %v755 = vrcp.pop %v754
    %v756 = vmul.f32 %v751, %v755
    %vm757 = vcmp.gt.f32.partialorder %v88, 0.0
    %v758 = vsel %vm757, %v756, 0.0
    %760 = vrot.lane.b32.xlu0 %v257, 96
    %v761 = vpop.permute.xlu0 %760
    %v764 = vsel %vm464, %v758, 0
    %766 = vmatprep.subr.mxu0 0.0
    %767 = vmatpush1.msra.mxu0 %v761
    %768 = vmatprep.subr.mxu0 0.0
    %769 = vmatpush1.msra.mxu0 0.0
    %770 = vmatprep.subr.mxu0 0.0
    %771 = vmatpush1.msra.mxu0 0.0
    %772 = vmatprep.subr.mxu0 0.0
    %773 = vmatpush1.msra.mxu0 0.0
    %774 = vmatprep.subr.mxu0 0.0
    %775 = vmatpush1.msra.mxu0 0.0
    %776 = vmatprep.subr.mxu0 0.0
    %777 = vmatpush1.msra.mxu0 0.0
    %778 = vmatprep.subr.mxu0 0.0
    %779 = vmatpush1.msra.mxu0 0.0
    %780 = vmatprep.subr.mxu0 0.0
    %781 = vmatpush1.msra.mxu0 0.0
    %782 = vmatprep.subr.mxu0 0.0
    %783 = vmatpush1.msra.mxu0 0.0
    %784 = vmatprep.subr.mxu0 0.0
    %785 = vmatpush1.msra.mxu0 0.0
    %786 = vmatprep.subr.mxu0 0.0
    %787 = vmatpush1.msra.mxu0 0.0
    %788 = vmatprep.subr.mxu0 0.0
    %789 = vmatpush1.msra.mxu0 0.0
    %790 = vmatprep.subr.mxu0 0.0
    %791 = vmatpush1.msra.mxu0 0.0
    %792 = vmatprep.subr.mxu0 0.0
    %793 = vmatpush1.msra.mxu0 0.0
    %794 = vmatprep.subr.mxu0 0.0
    %795 = vmatpush1.msra.mxu0 0.0
    %796 = vmatprep.subr.mxu0 0.0
    %797 = vmatpush1.msra.mxu0 0.0
    %798 = vmatprep.subr.mxu0 0.0
    %799 = vmatpush1.msra.mxu0 0.0
    %800 = vmatprep.subr.mxu0 0.0
    %801 = vmatpush1.msra.mxu0 0.0
    %802 = vmatprep.subr.mxu0 0.0
    %803 = vmatpush1.msra.mxu0 0.0
    %804 = vmatprep.subr.mxu0 0.0
    %805 = vmatpush1.msra.mxu0 0.0
    %806 = vmatprep.subr.mxu0 0.0
    %807 = vmatpush1.msra.mxu0 0.0
    %808 = vmatprep.subr.mxu0 0.0
    %809 = vmatpush1.msra.mxu0 0.0
    %810 = vmatprep.subr.mxu0 0.0
    %811 = vmatpush1.msra.mxu0 0.0
    %812 = vmatprep.subr.mxu0 0.0
    %813 = vmatpush1.msra.mxu0 0.0
    %814 = vmatprep.subr.mxu0 0.0
    %815 = vmatpush1.msra.mxu0 0.0
    %816 = vmatprep.subr.mxu0 0.0
    %817 = vmatpush1.msra.mxu0 0.0
    %818 = vmatprep.subr.mxu0 0.0
    %819 = vmatpush1.msra.mxu0 0.0
    %820 = vmatprep.subr.mxu0 0.0
    %821 = vmatpush1.msra.mxu0 0.0
    %822 = vmatprep.subr.mxu0 0.0
    %823 = vmatpush1.msra.mxu0 0.0
    %824 = vmatprep.subr.mxu0 0.0
    %825 = vmatpush1.msra.mxu0 0.0
    %826 = vmatprep.subr.mxu0 0.0
    %827 = vmatpush1.msra.mxu0 0.0
    %828 = vmatprep.subr.mxu0 0.0
    %829 = vmatpush1.msra.mxu0 0.0
    %830 = vmatprep.mubr.f32.mxu0 0.0
    %831 = vmatmul.mubr.f32.gmra.mrb[0].mxu0 %v764
    %v832 = vpop.f32.mrb[0].mxu0
    %v833 = vadd.f32 0.0, %v832
    %v834 = vpop.f32.mrb[0].mxu0
    %835 = vdwg.mxu0
    %v836 = vadd.f32 %v80, %v833
    %v837 = vmax.f32 %v836, 0.0
    %s838 = scalar_lea.vmem [#allocation10], 8
    %839 = vst.msk [vmem:[%s838] sm:$0xff] %vm93, %v837
    // Predicated region
    $region42: #{tpu_custom_call.1} parent=1 // pred_check
      _
    $region43: #{tpu_custom_call.1} parent=1 // pred_check_branch
      %841 = sbr.rel (0) target = $region45
    $region44: #{tpu_custom_call.1} parent=1 // pred_region
      %s843 = ssub.s32 256, 256
      %844 = vsyncadd [#allocation4], %s843
      %s845 = sshll.u32 [#allocation10], 4
      %s846 = int_to_ptr.vmem [resolvable:$true] %s845
      %851 = dma.vmem_to_hbm [thread:$0]  %s846, 256, %s6, [#allocation4], 128, 128, 8
    $region45: #{tpu_custom_call.1} parent=1 // pred_fallthru
      _
    // Predicated region
    $region46: #{tpu_custom_call.1} parent=1 // pred_check
      _
    $region47: #{tpu_custom_call.1} parent=1 // pred_check_branch
      %853 = sbr.rel (0) target = $region49
    $region48: #{tpu_custom_call.1} parent=1 // pred_region
      %854 = dma.done [#allocation4], 256
    $region49: #{tpu_custom_call.1} parent=1 // pred_fallthru
      _
    %855 = vsyncpa [#allocation3], 1
    %856 = vsyncpa [#allocation6], 1
    %857 = vsyncpa [#allocation9], 1
    %858 = vsyncpa [#allocation4], 1

</llo_original>
